<compile_context>
chip_gen: v6e
topology: v6e:2x2x1
jax: 0.10.0
libtpu: 0.0.40
codegen_flags: <defaults>
</compile_context>

<pallas_src>
import functools

import jax
import jax.numpy as jnp
from jax.experimental import pallas as pl
from jax.experimental.pallas import tpu as pltpu

H1_PAD = 256     # hidden 200 -> 256 lanes
H2_PAD = 384     # hidden 300 -> 384 lanes
OUT_PAD = 128    # action_dim -> 128-wide lane-dense output slab
MAX_TILE_B = 1024


def _round_up(n, m):
    return ((n + m - 1) // m) * m


def _choose_tile_b(batch):
    """Batch tile: big tiles to amortize per-step overhead, but >=2 tiles for
    medium/large batches so the 'parallel' axis can shard across both v7x
    TensorCores. Always a multiple of 8 (sublane)."""
    if batch <= 64:
        return _round_up(max(batch, 8), 8)
    half = -(-batch // 2)                      # ceil(batch / 2)
    return min(MAX_TILE_B, _round_up(half, 8))


def _actor_kernel(x_ref, w1_ref, b1_ref, w2_ref, b2_ref, w3_ref, b3_ref,
                  o_ref, *, max_action):
    # Layer 1: [B, S](bf16) @ [S, 256](bf16) -> f32 acc, bias + relu in f32.
    h1 = jnp.dot(x_ref[...].astype(jnp.bfloat16), w1_ref[...],
                 preferred_element_type=jnp.float32)
    h1 = jnp.maximum(h1 + b1_ref[...], 0.0)

    # Layer 2: [B, 256](bf16) @ [256, 384](bf16) -> f32, bias + relu in f32.
    h2 = jnp.dot(h1.astype(jnp.bfloat16), w2_ref[...],
                 preferred_element_type=jnp.float32)
    h2 = jnp.maximum(h2 + b2_ref[...], 0.0)

    # Layer 3: [B, 384](bf16) @ [384, 128](bf16) -> f32, tanh * max_action.
    h3 = jnp.dot(h2.astype(jnp.bfloat16), w3_ref[...],
                 preferred_element_type=jnp.float32)
    o_ref[...] = (jnp.tanh(h3 + b3_ref[...]) * max_action).astype(o_ref.dtype)


def prepare_actor_params(params):
    """One-time param prep: weights stored [in, out], lane dims zero-padded to
    128 multiples, weights cast to bf16 for the MXU, biases kept f32 as [1, N].

    Zero padding is numerically exact: padded hidden units are relu(0+0)=0 and
    contribute nothing downstream; padded output columns are sliced off.
    """
    state_dim = params["w1"].shape[0]
    action_dim = params["w3"].shape[1]

    def pad2(a, rows, cols):
        return jnp.pad(a, ((0, rows - a.shape[0]), (0, cols - a.shape[1])))

    return {
        "w1": pad2(params["w1"], state_dim, H1_PAD).astype(jnp.bfloat16),
        "b1": pad2(params["b1"].reshape(1, -1), 1, H1_PAD),
        "w2": pad2(params["w2"], H1_PAD, H2_PAD).astype(jnp.bfloat16),
        "b2": pad2(params["b2"].reshape(1, -1), 1, H2_PAD),
        "w3": pad2(params["w3"], H2_PAD, OUT_PAD).astype(jnp.bfloat16),
        "b3": pad2(params["b3"].reshape(1, -1), 1, OUT_PAD),
        "state_dim": state_dim,
        "action_dim": action_dim,
    }


def actor_forward(x, prepared, max_action):
    """Runs the full Actor MLP inside a single Pallas kernel.

    x:        [batch, state_dim] float32
    prepared: output of prepare_actor_params
    """
    batch, state_dim = x.shape
    action_dim = prepared["action_dim"]

    tile_b = _choose_tile_b(batch)
    grid = (pl.cdiv(batch, tile_b),)
    kernel = functools.partial(_actor_kernel, max_action=float(max_action))

    # Weights/biases: constant block index across the batch grid, so they are
    # loaded once and stay VMEM-resident (~0.33 MiB bf16 + small f32 biases).
    const = lambda shape: pl.BlockSpec(shape, lambda i: (0, 0))

    flops = 2 * batch * (state_dim * H1_PAD + H1_PAD * H2_PAD
                         + H2_PAD * OUT_PAD)
    bytes_accessed = (x.size * 4
                      + prepared["w1"].size * 2 + prepared["w2"].size * 2
                      + prepared["w3"].size * 2
                      + (prepared["b1"].size + prepared["b2"].size
                         + prepared["b3"].size) * 4
                      + batch * OUT_PAD * 4)
    cost = pl.CostEstimate(flops=flops,
                           transcendentals=batch * OUT_PAD,
                           bytes_accessed=bytes_accessed)

    out_padded = pl.pallas_call(
        kernel,
        out_shape=jax.ShapeDtypeStruct((batch, OUT_PAD), jnp.float32),
        grid=grid,
        in_specs=[
            pl.BlockSpec((tile_b, state_dim), lambda i: (i, 0)),
            const(prepared["w1"].shape),
            const(prepared["b1"].shape),
            const(prepared["w2"].shape),
            const(prepared["b2"].shape),
            const(prepared["w3"].shape),
            const(prepared["b3"].shape),
        ],
        out_specs=pl.BlockSpec((tile_b, OUT_PAD), lambda i: (i, 0)),
        compiler_params=pltpu.CompilerParams(
            dimension_semantics=("parallel",)),
        cost_estimate=cost,
    )(x, prepared["w1"], prepared["b1"], prepared["w2"], prepared["b2"],
      prepared["w3"], prepared["b3"])

    # Slice away the lane-padded output columns (any partial final batch tile
    # is masked on store / discarded here; rows are independent).
    return out_padded[:batch, :action_dim]


def init_actor_params(key, state_dim, action_dim):
    """Deterministic synthetic init matching the nn.Linear shapes.

    PyTorch stores Linear weights as [out, in]; we store the transpose
    [in, out] so the kernel does x @ W directly.
    """
    k1, k2, k3, k4, k5, k6 = jax.random.split(key, 6)
    scale = 0.05
    return {
        "w1": scale * jax.random.normal(k1, (state_dim, 200), jnp.float32),
        "b1": scale * jax.random.normal(k2, (200,), jnp.float32),
        "w2": scale * jax.random.normal(k3, (200, 300), jnp.float32),
        "b2": scale * jax.random.normal(k4, (300,), jnp.float32),
        "w3": scale * jax.random.normal(k5, (300, action_dim), jnp.float32),
        "b3": scale * jax.random.normal(k6, (action_dim,), jnp.float32),
    }


def actor_forward_ref(x, params, max_action):
    """Pure-JAX f32 reference of the PyTorch forward (unpadded params)."""
    h = jax.nn.relu(x @ params["w1"] + params["b1"])
    h = jax.nn.relu(h @ params["w2"] + params["b2"])
    return jnp.tanh(h @ params["w3"] + params["b3"]) * max_action


if __name__ == "__main__":
    key = jax.random.PRNGKey(0)
    kx, kp = jax.random.split(key)

    batch = 8
    state_dim = 32
    action_dim = 8
    max_action = 2.0

    x = jax.random.normal(kx, (batch, state_dim), jnp.float32)
    params = init_actor_params(kp, state_dim, action_dim)
    prepared = prepare_actor_params(params)   # one-time padding / bf16 cast

    out = actor_forward(x, prepared, max_action)
    out = jax.block_until_ready(out)

    ref = actor_forward_ref(x, params, max_action)
    assert out.shape == (batch, action_dim)
    # bf16 MXU inputs with f32 accumulation: tolerance loosened vs pure f32.
    assert jnp.allclose(out, ref, atol=2e-2, rtol=2e-2), "mismatch vs reference"

    print("KERNEL_OK")
</pallas_src>

<mosaic_0001>
module attributes {stable_mosaic.version = 11 : i64} {
  func.func @_actor_kernel(%arg0: i32, %arg1: memref<8x32xf32, #tpu.memory_space<vmem>>, %arg2: memref<32x256xbf16, #tpu.memory_space<vmem>>, %arg3: memref<1x256xf32, #tpu.memory_space<vmem>>, %arg4: memref<256x384xbf16, #tpu.memory_space<vmem>>, %arg5: memref<1x384xf32, #tpu.memory_space<vmem>>, %arg6: memref<384x128xbf16, #tpu.memory_space<vmem>>, %arg7: memref<1x128xf32, #tpu.memory_space<vmem>>, %arg8: memref<8x128xf32, #tpu.memory_space<vmem>>) attributes {dimension_semantics = [#tpu.dimension_semantics<parallel>], iteration_bounds = array<i64: 1>, scalar_prefetch = 0 : i64, scratch_operands = 0 : i64, tpu.core_type = #tpu.core_type<tc>, window_params = [{transform_indices = @transform_0, window_bounds = array<i64: 8, 32>}, {pipeline_mode = #tpu.pipeline_mode<synchronous>, transform_indices = @transform_1, window_bounds = array<i64: 32, 256>}, {pipeline_mode = #tpu.pipeline_mode<synchronous>, transform_indices = @transform_2, window_bounds = array<i64: 1, 256>}, {pipeline_mode = #tpu.pipeline_mode<synchronous>, transform_indices = @transform_3, window_bounds = array<i64: 256, 384>}, {pipeline_mode = #tpu.pipeline_mode<synchronous>, transform_indices = @transform_4, window_bounds = array<i64: 1, 384>}, {pipeline_mode = #tpu.pipeline_mode<synchronous>, transform_indices = @transform_5, window_bounds = array<i64: 384, 128>}, {pipeline_mode = #tpu.pipeline_mode<synchronous>, transform_indices = @transform_6, window_bounds = array<i64: 1, 128>}, {transform_indices = @transform_7, window_bounds = array<i64: 8, 128>}]} {
    %c0 = arith.constant 0 : index
    %c0_0 = arith.constant 0 : index
    %0 = vector.load %arg1[%c0, %c0_0] : memref<8x32xf32, #tpu.memory_space<vmem>>, vector<8x32xf32>
    %1 = arith.truncf %0 : vector<8x32xf32> to vector<8x32xbf16>
    %c0_1 = arith.constant 0 : index
    %c0_2 = arith.constant 0 : index
    %2 = vector.load %arg2[%c0_1, %c0_2] : memref<32x256xbf16, #tpu.memory_space<vmem>>, vector<32x256xbf16>
    %cst = arith.constant dense<0.000000e+00> : vector<8x256xf32>
    %3 = tpu.matmul %1, %2, %cst {dimension_numbers = #tpu.dot_dimension_numbers<[1], [0], [0], [1], [0, 0, 1, 1], [], []>} : vector<8x32xbf16>, vector<32x256xbf16>, vector<8x256xf32> -> vector<8x256xf32>
    %c0_3 = arith.constant 0 : index
    %c0_4 = arith.constant 0 : index
    %4 = vector.load %arg3[%c0_3, %c0_4] : memref<1x256xf32, #tpu.memory_space<vmem>>, vector<1x256xf32>
    %5 = vector.broadcast %4 : vector<1x256xf32> to vector<8x256xf32>
    %6 = arith.addf %3, %5 : vector<8x256xf32>
    %cst_5 = arith.constant 0.000000e+00 : f32
    %7 = vector.broadcast %cst_5 : f32 to vector<8x256xf32>
    %8 = arith.maximumf %6, %7 : vector<8x256xf32>
    %9 = arith.truncf %8 : vector<8x256xf32> to vector<8x256xbf16>
    %c0_6 = arith.constant 0 : index
    %c0_7 = arith.constant 0 : index
    %10 = vector.load %arg4[%c0_6, %c0_7] : memref<256x384xbf16, #tpu.memory_space<vmem>>, vector<256x384xbf16>
    %cst_8 = arith.constant dense<0.000000e+00> : vector<8x384xf32>
    %11 = tpu.matmul %9, %10, %cst_8 {dimension_numbers = #tpu.dot_dimension_numbers<[1], [0], [0], [1], [0, 0, 1, 1], [], []>} : vector<8x256xbf16>, vector<256x384xbf16>, vector<8x384xf32> -> vector<8x384xf32>
    %c0_9 = arith.constant 0 : index
    %c0_10 = arith.constant 0 : index
    %12 = vector.load %arg5[%c0_9, %c0_10] : memref<1x384xf32, #tpu.memory_space<vmem>>, vector<1x384xf32>
    %13 = vector.broadcast %12 : vector<1x384xf32> to vector<8x384xf32>
    %14 = arith.addf %11, %13 : vector<8x384xf32>
    %cst_11 = arith.constant 0.000000e+00 : f32
    %15 = vector.broadcast %cst_11 : f32 to vector<8x384xf32>
    %16 = arith.maximumf %14, %15 : vector<8x384xf32>
    %17 = arith.truncf %16 : vector<8x384xf32> to vector<8x384xbf16>
    %c0_12 = arith.constant 0 : index
    %c0_13 = arith.constant 0 : index
    %18 = vector.load %arg6[%c0_12, %c0_13] : memref<384x128xbf16, #tpu.memory_space<vmem>>, vector<384x128xbf16>
    %cst_14 = arith.constant dense<0.000000e+00> : vector<8x128xf32>
    %19 = tpu.matmul %17, %18, %cst_14 {dimension_numbers = #tpu.dot_dimension_numbers<[1], [0], [0], [1], [0, 0, 1, 1], [], []>} : vector<8x384xbf16>, vector<384x128xbf16>, vector<8x128xf32> -> vector<8x128xf32>
    %c0_15 = arith.constant 0 : index
    %c0_16 = arith.constant 0 : index
    %20 = vector.load %arg7[%c0_15, %c0_16] : memref<1x128xf32, #tpu.memory_space<vmem>>, vector<1x128xf32>
    %21 = vector.broadcast %20 : vector<1x128xf32> to vector<8x128xf32>
    %22 = arith.addf %19, %21 : vector<8x128xf32>
    %23 = math.tanh %22 : vector<8x128xf32>
    %cst_17 = arith.constant 2.000000e+00 : f32
    %24 = vector.broadcast %cst_17 : f32 to vector<8x128xf32>
    %25 = arith.mulf %23, %24 : vector<8x128xf32>
    %c0_18 = arith.constant 0 : index
    %c0_19 = arith.constant 0 : index
    %26 = vector.load %arg8[%c0_18, %c0_19] : memref<8x128xf32, #tpu.memory_space<vmem>>, vector<8x128xf32>
    tpu.vector_store %arg8[%c0_18, %c0_19], %25 {strides = array<i32>} : memref<8x128xf32, #tpu.memory_space<vmem>>, vector<8x128xf32>,
    return
  }
  func.func @transform_0(%arg0: i32) -> (i32, i32) {
    %c0_i32 = arith.constant 0 : i32
    %c0_i32_0 = arith.constant 0 : i32
    return %arg0, %c0_i32 : i32, i32
  }
  func.func @transform_1(%arg0: i32) -> (i32, i32) {
    %c0_i32 = arith.constant 0 : i32
    %c0_i32_0 = arith.constant 0 : i32
    %c0_i32_1 = arith.constant 0 : i32
    return %c0_i32, %c0_i32_0 : i32, i32
  }
  func.func @transform_2(%arg0: i32) -> (i32, i32) {
    %c0_i32 = arith.constant 0 : i32
    %c0_i32_0 = arith.constant 0 : i32
    %c0_i32_1 = arith.constant 0 : i32
    return %c0_i32, %c0_i32_0 : i32, i32
  }
  func.func @transform_3(%arg0: i32) -> (i32, i32) {
    %c0_i32 = arith.constant 0 : i32
    %c0_i32_0 = arith.constant 0 : i32
    %c0_i32_1 = arith.constant 0 : i32
    return %c0_i32, %c0_i32_0 : i32, i32
  }
  func.func @transform_4(%arg0: i32) -> (i32, i32) {
    %c0_i32 = arith.constant 0 : i32
    %c0_i32_0 = arith.constant 0 : i32
    %c0_i32_1 = arith.constant 0 : i32
    return %c0_i32, %c0_i32_0 : i32, i32
  }
  func.func @transform_5(%arg0: i32) -> (i32, i32) {
    %c0_i32 = arith.constant 0 : i32
    %c0_i32_0 = arith.constant 0 : i32
    %c0_i32_1 = arith.constant 0 : i32
    return %c0_i32, %c0_i32_0 : i32, i32
  }
  func.func @transform_6(%arg0: i32) -> (i32, i32) {
    %c0_i32 = arith.constant 0 : i32
    %c0_i32_0 = arith.constant 0 : i32
    %c0_i32_1 = arith.constant 0 : i32
    return %c0_i32, %c0_i32_0 : i32, i32
  }
  func.func @transform_7(%arg0: i32) -> (i32, i32) {
    %c0_i32 = arith.constant 0 : i32
    %c0_i32_0 = arith.constant 0 : i32
    return %arg0, %c0_i32 : i32, i32
  }
}

</mosaic_0001>

<llo_original>
// kernel: tpu_custom_call.1
$region0: #{tpu_custom_call.1}
  #allocation0 [shape = 'u32[]', space=smem, size = 0x4, offset = 0x4, fixed_abs, tag = 'smem constant byte address 0x4 - core index']
  #allocation1 [shape = 'u32[144,128]{1,0:T(1,128)}', space=vmem, size = 0x12000, scoped, tag = 'internal scratch']
  %s0 = inlined_call_operand.hbm [shape: f32[8,32], index: 0, kind: input, shape index: {}]
  %s1 = inlined_call_operand.hbm [shape: bf16[32,256], index: 1, kind: input, shape index: {}]
  %s2 = inlined_call_operand.vmem [shape: f32[1,256], index: 2, kind: input, shape index: {}]
  %s3 = inlined_call_operand.hbm [shape: bf16[256,384], index: 3, kind: input, shape index: {}]
  %s4 = inlined_call_operand.vmem [shape: f32[1,384], index: 4, kind: input, shape index: {}]
  %s5 = inlined_call_operand.hbm [shape: bf16[384,128], index: 5, kind: input, shape index: {}]
  %s6 = inlined_call_operand.vmem [shape: f32[1,128], index: 6, kind: input, shape index: {}]
  %s7 = inlined_call_operand.hbm [shape: f32[8,128], index: 7, kind: output, shape index: {}]
  %s8 = sld [smem:[#allocation0]]
  $region54: #{tpu_custom_call.1} parent=0
    _
  %s10 = ssub.s32 1, %s8
  %s11 = scalar_select 0, %s10, %s8
  $region1: #{tpu_custom_call.1} parent=0
    #allocation2 [shape = 'u8[4096]{0}', space=vmem, size = 0x1000, scoped, tag = 'input window, operand 0, single buffered']
    #allocation3 [shape = 's32[1]{0}', space=sflag, size = 0x4, scoped, tag = 'scoped memory for tpu_custom_call.1']
    #allocation4 [shape = 's32[1]{0}', space=sflag, size = 0x4, scoped, tag = 'scoped memory for tpu_custom_call.1']
    #allocation5 [shape = 'u8[16384]{0}', space=vmem, size = 0x4000, scoped, tag = 'input window, operand 1, single buffered']
    #allocation6 [shape = 's32[1]{0}', space=sflag, size = 0x4, scoped, tag = 'scoped memory for tpu_custom_call.1']
    #allocation7 [shape = 'u8[196608]{0}', space=vmem, size = 0x30000, scoped, tag = 'input window, operand 3, single buffered']
    #allocation8 [shape = 'u8[98304]{0}', space=vmem, size = 0x18000, scoped, tag = 'input window, operand 5, single buffered']
    #allocation9 [shape = 's32[1]{0}', space=sflag, size = 0x4, scoped, tag = 'scoped memory for tpu_custom_call.1']
    #allocation10 [shape = 'u8[4096]{0}', space=vmem, size = 0x1000, scoped, tag = 'output window, operand 0, single buffered']
    %12 = vsyncpa [#allocation3], 0
    %13 = vsyncpa [#allocation6], 0
    %14 = vsyncpa [#allocation9], 0
    %15 = vsyncpa [#allocation4], 0
    // Predicated region
    $region2: #{tpu_custom_call.1} parent=1 // pred_check
      _
    $region3: #{tpu_custom_call.1} parent=1 // pred_check_branch
      %17 = sbr.rel (0) target = $region5
    $region4: #{tpu_custom_call.1} parent=1 // pred_region
      %s19 = ssub.s32 128, 128
      %20 = vsyncadd [#allocation3], %s19
      %s22 = sshll.u32 [#allocation2], 4
      %s23 = int_to_ptr.vmem [resolvable:$true] %s22
      %25 = dma.hbm_to_vmem [thread:$0]  %s0, 128, %s23, [#allocation3]
    $region5: #{tpu_custom_call.1} parent=1 // pred_fallthru
      _
    // Predicated region
    $region6: #{tpu_custom_call.1} parent=1 // pred_check
      _
    $region7: #{tpu_custom_call.1} parent=1 // pred_check_branch
      %27 = sbr.rel (0) target = $region9
    $region8: #{tpu_custom_call.1} parent=1 // pred_region
      %s29 = ssub.s32 512, 512
      %30 = vsyncadd [#allocation6], %s29
      %s31 = sshll.u32 [#allocation5], 4
      %s32 = int_to_ptr.vmem [resolvable:$true] %s31
      %37 = dma.hbm_to_vmem [thread:$0]  %s1, 512, %s32, [#allocation6], 128, 128, 8
    $region9: #{tpu_custom_call.1} parent=1 // pred_fallthru
      _
    // Predicated region
    $region10: #{tpu_custom_call.1} parent=1 // pred_check
      _
    $region11: #{tpu_custom_call.1} parent=1 // pred_check_branch
      %39 = sbr.rel (0) target = $region13
    $region12: #{tpu_custom_call.1} parent=1 // pred_region
      _
    $region13: #{tpu_custom_call.1} parent=1 // pred_fallthru
      _
    // Predicated region
    $region14: #{tpu_custom_call.1} parent=1 // pred_check
      _
    $region15: #{tpu_custom_call.1} parent=1 // pred_check_branch
      %41 = sbr.rel (0) target = $region17
    $region16: #{tpu_custom_call.1} parent=1 // pred_region
      %s43 = ssub.s32 6144, 6144
      %44 = vsyncadd [#allocation6], %s43
      %s45 = sshll.u32 [#allocation7], 4
      %s46 = int_to_ptr.vmem [resolvable:$true] %s45
      %51 = dma.hbm_to_vmem [thread:$0]  %s3, 6144, %s46, [#allocation6], 192, 192, 12
    $region17: #{tpu_custom_call.1} parent=1 // pred_fallthru
      _
    // Predicated region
    $region18: #{tpu_custom_call.1} parent=1 // pred_check
      _
    $region19: #{tpu_custom_call.1} parent=1 // pred_check_branch
      %53 = sbr.rel (0) target = $region21
    $region20: #{tpu_custom_call.1} parent=1 // pred_region
      _
    $region21: #{tpu_custom_call.1} parent=1 // pred_fallthru
      _
    // Predicated region
    $region22: #{tpu_custom_call.1} parent=1 // pred_check
      _
    $region23: #{tpu_custom_call.1} parent=1 // pred_check_branch
      %55 = sbr.rel (0) target = $region25
    $region24: #{tpu_custom_call.1} parent=1 // pred_region
      %s57 = ssub.s32 3072, 3072
      %58 = vsyncadd [#allocation9], %s57
      %s59 = sshll.u32 [#allocation8], 4
      %s60 = int_to_ptr.vmem [resolvable:$true] %s59
      %65 = dma.hbm_to_vmem [thread:$0]  %s5, 3072, %s60, [#allocation9], 64, 64, 4
    $region25: #{tpu_custom_call.1} parent=1 // pred_fallthru
      _
    // Predicated region
    $region26: #{tpu_custom_call.1} parent=1 // pred_check
      _
    $region27: #{tpu_custom_call.1} parent=1 // pred_check_branch
      %67 = sbr.rel (0) target = $region29
    $region28: #{tpu_custom_call.1} parent=1 // pred_region
      _
    $region29: #{tpu_custom_call.1} parent=1 // pred_fallthru
      _
    // Predicated region
    $region30: #{tpu_custom_call.1} parent=1 // pred_check
      _
    $region31: #{tpu_custom_call.1} parent=1 // pred_check_branch
      %69 = sbr.rel (0) target = $region33
    $region32: #{tpu_custom_call.1} parent=1 // pred_region
      %70 = dma.done [#allocation3], 128
    $region33: #{tpu_custom_call.1} parent=1 // pred_fallthru
      _
    // Predicated region
    $region34: #{tpu_custom_call.1} parent=1 // pred_check
      _
    $region35: #{tpu_custom_call.1} parent=1 // pred_check_branch
      %72 = sbr.rel (0) target = $region37
    $region36: #{tpu_custom_call.1} parent=1 // pred_region
      %73 = dma.done [#allocation6], 512
    $region37: #{tpu_custom_call.1} parent=1 // pred_fallthru
      _
    // Predicated region
    $region38: #{tpu_custom_call.1} parent=1 // pred_check
      _
    $region39: #{tpu_custom_call.1} parent=1 // pred_check_branch
      %75 = sbr.rel (0) target = $region41
    $region40: #{tpu_custom_call.1} parent=1 // pred_region
      %76 = dma.done [#allocation6], 6144
    $region41: #{tpu_custom_call.1} parent=1 // pred_fallthru
      _
    // Predicated region
    $region42: #{tpu_custom_call.1} parent=1 // pred_check
      _
    $region43: #{tpu_custom_call.1} parent=1 // pred_check_branch
      %78 = sbr.rel (0) target = $region45
    $region44: #{tpu_custom_call.1} parent=1 // pred_region
      %79 = dma.done [#allocation9], 3072
    $region45: #{tpu_custom_call.1} parent=1 // pred_fallthru
      _
    %v81 = vld [vmem:[#allocation2] sm:$0xff]
    %v82 = vpack.c.bf16 %v81, %v81
    %v83 = vld [vmem:[#allocation5] sm:$0xff]
    %v84 = vld [vmem:[#allocation5 + $0x8] sm:$0xff]
    %v85 = vld [vmem:[#allocation5 + $0x10] sm:$0xff]
    %v86 = vld [vmem:[#allocation5 + $0x18] sm:$0xff]
    %v87 = vld [vmem:[%s2] sm:$0x3]
    %v89 = vlaneseq
    %v90 = vshrl.u32 %v89, 7
    %v91 = vsub.s32 0, %v90
    %v92 = vrot.slane %v87, %v91
    %v93 = vlaneseq
    %v94 = vshrl.u32 %v93, 7
    %v95 = vsub.s32 1, %v94
    %v96 = vrot.slane %v87, %v95
    %v103 = vunpack.c.l.b16 %v83
    %v104 = vunpack.c.h.b16 %v83
    %v105 = vunpack.c.l.b16 %v84
    %v106 = vunpack.c.h.b16 %v84
    %v107 = vunpack.c.l.b16 %v85
    %v108 = vunpack.c.h.b16 %v85
    %v109 = vunpack.c.l.b16 %v86
    %v110 = vunpack.c.h.b16 %v86
    %v111 = vpack.c.b16 %v105, %v103
    %v112 = vpack.c.b16 %v106, %v104
    %v113 = vpack.c.b16 %v109, %v107
    %v114 = vpack.c.b16 %v110, %v108
    %vm119 = vcmask 261120
    %v121 = vsel %vm119, %v82, 0
    %123 = vmatprep.subr.bf16.mxu0 0
    %124 = vmatpush1.bf16.msra.mxu0 0
    %125 = vmatprep.subr.bf16.mxu0 0
    %126 = vmatpush1.bf16.msra.mxu0 0
    %127 = vmatprep.subr.bf16.mxu0 0
    %128 = vmatpush1.bf16.msra.mxu0 0
    %129 = vmatprep.subr.bf16.mxu0 0
    %130 = vmatpush1.bf16.msra.mxu0 0
    %131 = vmatprep.subr.bf16.mxu0 0
    %132 = vmatpush1.bf16.msra.mxu0 0
    %133 = vmatprep.subr.bf16.mxu0 0
    %134 = vmatpush1.bf16.msra.mxu0 0
    %135 = vmatprep.subr.bf16.mxu0 %v114
    %136 = vmatpush1.bf16.msra.mxu0 %v113
    %137 = vmatprep.subr.bf16.mxu0 %v112
    %138 = vmatpush1.bf16.msra.mxu0 %v111
    %139 = vmatprep.subr.bf16.mxu0 0
    %140 = vmatpush2.bf16.msra.mxu0 0
    %141 = vmatprep.subr.bf16.mxu0 0
    %142 = vmatpush2.bf16.msra.mxu0 0
    %143 = vmatprep.subr.bf16.mxu0 0
    %144 = vmatpush2.bf16.msra.mxu0 0
    %145 = vmatprep.subr.bf16.mxu0 0
    %146 = vmatpush2.bf16.msra.mxu0 0
    %147 = vmatprep.subr.bf16.mxu0 0
    %148 = vmatpush2.bf16.msra.mxu0 0
    %149 = vmatprep.subr.bf16.mxu0 0
    %150 = vmatpush2.bf16.msra.mxu0 0
    %151 = vmatprep.subr.bf16.mxu0 0
    %152 = vmatpush2.bf16.msra.mxu0 0
    %153 = vmatprep.subr.bf16.mxu0 0
    %154 = vmatpush2.bf16.msra.mxu0 0
    %155 = vmatprep.mubr.bf16.mxu0 0
    %156 = vmatmul.mubr.bf16.gmra.mxu0 %v121
    %v157 = vpop.f32.mrf.mxu0
    %v158 = vadd.f32 %v92, %v157
    %v159 = vpop.f32.mrf.mxu0
    %v160 = vadd.f32 %v96, %v159
    %v161 = vpop.f32.mrf.mxu0
    %v162 = vpop.f32.mrf.mxu0
    %163 = vdwg.mxu0
    %v164 = vmax.f32 %v158, 0.0
    %v165 = vmax.f32 %v160, 0.0
    %v166 = vpack.c.bf16 %v164, %v164
    %v167 = vpack.c.bf16 %v165, %v165
    %v168 = vld [vmem:[#allocation7] sm:$0xff]
    %v169 = vld [vmem:[#allocation7 + $0x8] sm:$0xf]
    %v170 = vld [vmem:[#allocation7 + $0xc] sm:$0xff]
    %v171 = vld [vmem:[#allocation7 + $0x14] sm:$0xf]
    %v172 = vld [vmem:[#allocation7 + $0x18] sm:$0xff]
    %v173 = vld [vmem:[#allocation7 + $0x20] sm:$0xf]
    %v174 = vld [vmem:[#allocation7 + $0x24] sm:$0xff]
    %v175 = vld [vmem:[#allocation7 + $0x2c] sm:$0xf]
    %v176 = vld [vmem:[#allocation7 + $0x30] sm:$0xff]
    %v177 = vld [vmem:[#allocation7 + $0x38] sm:$0xf]
    %v178 = vld [vmem:[#allocation7 + $0x3c] sm:$0xff]
    %v179 = vld [vmem:[#allocation7 + $0x44] sm:$0xf]
    %v180 = vld [vmem:[#allocation7 + $0x48] sm:$0xff]
    %v181 = vld [vmem:[#allocation7 + $0x50] sm:$0xf]
    %v182 = vld [vmem:[#allocation7 + $0x54] sm:$0xff]
    %v183 = vld [vmem:[#allocation7 + $0x5c] sm:$0xf]
    %v184 = vld [vmem:[#allocation7 + $0x60] sm:$0xff]
    %v185 = vld [vmem:[#allocation7 + $0x68] sm:$0xf]
    %v186 = vld [vmem:[#allocation7 + $0x6c] sm:$0xff]
    %v187 = vld [vmem:[#allocation7 + $0x74] sm:$0xf]
    %v188 = vld [vmem:[#allocation7 + $0x78] sm:$0xff]
    %v189 = vld [vmem:[#allocation7 + $0x80] sm:$0xf]
    %v190 = vld [vmem:[#allocation7 + $0x84] sm:$0xff]
    %v191 = vld [vmem:[#allocation7 + $0x8c] sm:$0xf]
    %v192 = vld [vmem:[#allocation7 + $0x90] sm:$0xff]
    %v193 = vld [vmem:[#allocation7 + $0x98] sm:$0xf]
    %v194 = vld [vmem:[#allocation7 + $0x9c] sm:$0xff]
    %v195 = vld [vmem:[#allocation7 + $0xa4] sm:$0xf]
    %v196 = vld [vmem:[#allocation7 + $0xa8] sm:$0xff]
    %v197 = vld [vmem:[#allocation7 + $0xb0] sm:$0xf]
    %v198 = vld [vmem:[#allocation7 + $0xb4] sm:$0xff]
    %v199 = vld [vmem:[#allocation7 + $0xbc] sm:$0xf]
    %v200 = vld [vmem:[#allocation7 + $0xc0] sm:$0xff]
    %v201 = vld [vmem:[#allocation7 + $0xc8] sm:$0xf]
    %v202 = vld [vmem:[#allocation7 + $0xcc] sm:$0xff]
    %v203 = vld [vmem:[#allocation7 + $0xd4] sm:$0xf]
    %v204 = vld [vmem:[#allocation7 + $0xd8] sm:$0xff]
    %v205 = vld [vmem:[#allocation7 + $0xe0] sm:$0xf]
    %v206 = vld [vmem:[#allocation7 + $0xe4] sm:$0xff]
    %v207 = vld [vmem:[#allocation7 + $0xec] sm:$0xf]
    %v208 = vld [vmem:[#allocation7 + $0xf0] sm:$0xff]
    %v209 = vld [vmem:[#allocation7 + $0xf8] sm:$0xf]
    %v210 = vld [vmem:[#allocation7 + $0xfc] sm:$0xff]
    %v211 = vld [vmem:[#allocation7 + $0x104] sm:$0xf]
    %v212 = vld [vmem:[#allocation7 + $0x108] sm:$0xff]
    %v213 = vld [vmem:[#allocation7 + $0x110] sm:$0xf]
    %v214 = vld [vmem:[#allocation7 + $0x114] sm:$0xff]
    %v215 = vld [vmem:[#allocation7 + $0x11c] sm:$0xf]
    %v216 = vld [vmem:[#allocation7 + $0x120] sm:$0xff]
    %v217 = vld [vmem:[#allocation7 + $0x128] sm:$0xf]
    %v218 = vld [vmem:[#allocation7 + $0x12c] sm:$0xff]
    %v219 = vld [vmem:[#allocation7 + $0x134] sm:$0xf]
    %v220 = vld [vmem:[#allocation7 + $0x138] sm:$0xff]
    %v221 = vld [vmem:[#allocation7 + $0x140] sm:$0xf]
    %v222 = vld [vmem:[#allocation7 + $0x144] sm:$0xff]
    %v223 = vld [vmem:[#allocation7 + $0x14c] sm:$0xf]
    %v224 = vld [vmem:[#allocation7 + $0x150] sm:$0xff]
    %v225 = vld [vmem:[#allocation7 + $0x158] sm:$0xf]
    %v226 = vld [vmem:[#allocation7 + $0x15c] sm:$0xff]
    %v227 = vld [vmem:[#allocation7 + $0x164] sm:$0xf]
    %v228 = vld [vmem:[#allocation7 + $0x168] sm:$0xff]
    %v229 = vld [vmem:[#allocation7 + $0x170] sm:$0xf]
    %v230 = vld [vmem:[#allocation7 + $0x174] sm:$0xff]
    %v231 = vld [vmem:[#allocation7 + $0x17c] sm:$0xf]
    %v232 = vld [vmem:[%s4] sm:$0x7]
    %v234 = vlaneseq
    %v235 = vshrl.u32 %v234, 7
    %v236 = vsub.s32 0, %v235
    %v237 = vrot.slane %v232, %v236
    %v238 = vlaneseq
    %v239 = vshrl.u32 %v238, 7
    %v240 = vsub.s32 1, %v239
    %v241 = vrot.slane %v232, %v240
    %v242 = vlaneseq
    %v243 = vshrl.u32 %v242, 7
    %v244 = vsub.s32 2, %v243
    %v245 = vrot.slane %v232, %v244
    %v313 = vunpack.c.l.b16 %v168
    %v314 = vunpack.c.h.b16 %v168
    %v315 = vunpack.c.l.b16 %v169
    %v316 = vunpack.c.l.b16 %v170
    %v317 = vunpack.c.h.b16 %v170
    %v318 = vunpack.c.l.b16 %v171
    %v319 = vunpack.c.l.b16 %v172
    %v320 = vunpack.c.h.b16 %v172
    %v321 = vunpack.c.l.b16 %v173
    %v322 = vunpack.c.l.b16 %v174
    %v323 = vunpack.c.h.b16 %v174
    %v324 = vunpack.c.l.b16 %v175
    %v325 = vunpack.c.l.b16 %v176
    %v326 = vunpack.c.h.b16 %v176
    %v327 = vunpack.c.l.b16 %v177
    %v328 = vunpack.c.l.b16 %v178
    %v329 = vunpack.c.h.b16 %v178
    %v330 = vunpack.c.l.b16 %v179
    %v331 = vunpack.c.l.b16 %v180
    %v332 = vunpack.c.h.b16 %v180
    %v333 = vunpack.c.l.b16 %v181
    %v334 = vunpack.c.l.b16 %v182
    %v335 = vunpack.c.h.b16 %v182
    %v336 = vunpack.c.l.b16 %v183
    %v337 = vunpack.c.l.b16 %v184
    %v338 = vunpack.c.h.b16 %v184
    %v339 = vunpack.c.l.b16 %v185
    %v340 = vunpack.c.l.b16 %v186
    %v341 = vunpack.c.h.b16 %v186
    %v342 = vunpack.c.l.b16 %v187
    %v343 = vunpack.c.l.b16 %v188
    %v344 = vunpack.c.h.b16 %v188
    %v345 = vunpack.c.l.b16 %v189
    %v346 = vunpack.c.l.b16 %v190
    %v347 = vunpack.c.h.b16 %v190
    %v348 = vunpack.c.l.b16 %v191
    %v349 = vunpack.c.l.b16 %v192
    %v350 = vunpack.c.h.b16 %v192
    %v351 = vunpack.c.l.b16 %v193
    %v352 = vunpack.c.l.b16 %v194
    %v353 = vunpack.c.h.b16 %v194
    %v354 = vunpack.c.l.b16 %v195
    %v355 = vunpack.c.l.b16 %v196
    %v356 = vunpack.c.h.b16 %v196
    %v357 = vunpack.c.l.b16 %v197
    %v358 = vunpack.c.l.b16 %v198
    %v359 = vunpack.c.h.b16 %v198
    %v360 = vunpack.c.l.b16 %v199
    %v361 = vunpack.c.l.b16 %v200
    %v362 = vunpack.c.h.b16 %v200
    %v363 = vunpack.c.l.b16 %v201
    %v364 = vunpack.c.l.b16 %v202
    %v365 = vunpack.c.h.b16 %v202
    %v366 = vunpack.c.l.b16 %v203
    %v367 = vunpack.c.l.b16 %v204
    %v368 = vunpack.c.h.b16 %v204
    %v369 = vunpack.c.l.b16 %v205
    %v370 = vunpack.c.l.b16 %v206
    %v371 = vunpack.c.h.b16 %v206
    %v372 = vunpack.c.l.b16 %v207
    %v373 = vunpack.c.l.b16 %v208
    %v374 = vunpack.c.h.b16 %v208
    %v375 = vunpack.c.l.b16 %v209
    %v376 = vunpack.c.l.b16 %v210
    %v377 = vunpack.c.h.b16 %v210
    %v378 = vunpack.c.l.b16 %v211
    %v379 = vunpack.c.l.b16 %v212
    %v380 = vunpack.c.h.b16 %v212
    %v381 = vunpack.c.l.b16 %v213
    %v382 = vunpack.c.l.b16 %v214
    %v383 = vunpack.c.h.b16 %v214
    %v384 = vunpack.c.l.b16 %v215
    %v385 = vunpack.c.l.b16 %v216
    %v386 = vunpack.c.h.b16 %v216
    %v387 = vunpack.c.l.b16 %v217
    %v388 = vunpack.c.l.b16 %v218
    %v389 = vunpack.c.h.b16 %v218
    %v390 = vunpack.c.l.b16 %v219
    %v391 = vunpack.c.l.b16 %v220
    %v392 = vunpack.c.h.b16 %v220
    %v393 = vunpack.c.l.b16 %v221
    %v394 = vunpack.c.l.b16 %v222
    %v395 = vunpack.c.h.b16 %v222
    %v396 = vunpack.c.l.b16 %v223
    %v397 = vunpack.c.l.b16 %v224
    %v398 = vunpack.c.h.b16 %v224
    %v399 = vunpack.c.l.b16 %v225
    %v400 = vunpack.c.l.b16 %v226
    %v401 = vunpack.c.h.b16 %v226
    %v402 = vunpack.c.l.b16 %v227
    %v403 = vunpack.c.l.b16 %v228
    %v404 = vunpack.c.h.b16 %v228
    %v405 = vunpack.c.l.b16 %v229
    %v406 = vunpack.c.l.b16 %v230
    %v407 = vunpack.c.h.b16 %v230
    %v408 = vunpack.c.l.b16 %v231
    %v409 = vpack.c.b16 %v316, %v313
    %v410 = vpack.c.b16 %v317, %v314
    %v411 = vpack.c.b16 %v318, %v315
    %v412 = vpack.c.b16 %v322, %v319
    %v413 = vpack.c.b16 %v323, %v320
    %v414 = vpack.c.b16 %v324, %v321
    %v415 = vpack.c.b16 %v328, %v325
    %v416 = vpack.c.b16 %v329, %v326
    %v417 = vpack.c.b16 %v330, %v327
    %v418 = vpack.c.b16 %v334, %v331
    %v419 = vpack.c.b16 %v335, %v332
    %v420 = vpack.c.b16 %v336, %v333
    %v421 = vpack.c.b16 %v340, %v337
    %v422 = vpack.c.b16 %v341, %v338
    %v423 = vpack.c.b16 %v342, %v339
    %v424 = vpack.c.b16 %v346, %v343
    %v425 = vpack.c.b16 %v347, %v344
    %v426 = vpack.c.b16 %v348, %v345
    %v427 = vpack.c.b16 %v352, %v349
    %v428 = vpack.c.b16 %v353, %v350
    %v429 = vpack.c.b16 %v354, %v351
    %v430 = vpack.c.b16 %v358, %v355
    %v431 = vpack.c.b16 %v359, %v356
    %v432 = vpack.c.b16 %v360, %v357
    %v433 = vpack.c.b16 %v364, %v361
    %v434 = vpack.c.b16 %v365, %v362
    %v435 = vpack.c.b16 %v366, %v363
    %v436 = vpack.c.b16 %v370, %v367
    %v437 = vpack.c.b16 %v371, %v368
    %v438 = vpack.c.b16 %v372, %v369
    %v439 = vpack.c.b16 %v376, %v373
    %v440 = vpack.c.b16 %v377, %v374
    %v441 = vpack.c.b16 %v378, %v375
    %v442 = vpack.c.b16 %v382, %v379
    %v443 = vpack.c.b16 %v383, %v380
    %v444 = vpack.c.b16 %v384, %v381
    %v445 = vpack.c.b16 %v388, %v385
    %v446 = vpack.c.b16 %v389, %v386
    %v447 = vpack.c.b16 %v390, %v387
    %v448 = vpack.c.b16 %v394, %v391
    %v449 = vpack.c.b16 %v395, %v392
    %v450 = vpack.c.b16 %v396, %v393
    %v451 = vpack.c.b16 %v400, %v397
    %v452 = vpack.c.b16 %v401, %v398
    %v453 = vpack.c.b16 %v402, %v399
    %v454 = vpack.c.b16 %v406, %v403
    %v455 = vpack.c.b16 %v407, %v404
    %v456 = vpack.c.b16 %v408, %v405
    %505 = vmatprep.subr.bf16.mxu0 %v431
    %506 = vmatpush1.bf16.msra.mxu0 %v430
    %507 = vmatprep.subr.bf16.mxu0 %v428
    %508 = vmatpush1.bf16.msra.mxu0 %v427
    %509 = vmatprep.subr.bf16.mxu0 %v425
    %510 = vmatpush1.bf16.msra.mxu0 %v424
    %511 = vmatprep.subr.bf16.mxu0 %v422
    %512 = vmatpush1.bf16.msra.mxu0 %v421
    %513 = vmatprep.subr.bf16.mxu0 %v419
    %514 = vmatpush1.bf16.msra.mxu0 %v418
    %515 = vmatprep.subr.bf16.mxu0 %v416
    %516 = vmatpush1.bf16.msra.mxu0 %v415
    %517 = vmatprep.subr.bf16.mxu0 %v413
    %518 = vmatpush1.bf16.msra.mxu0 %v412
    %519 = vmatprep.subr.bf16.mxu0 %v410
    %520 = vmatpush1.bf16.msra.mxu0 %v409
    %521 = vmatprep.subr.bf16.mxu0 %v455
    %522 = vmatpush2.bf16.msra.mxu0 %v454
    %523 = vmatprep.subr.bf16.mxu0 %v452
    %524 = vmatpush2.bf16.msra.mxu0 %v451
    %525 = vmatprep.subr.bf16.mxu0 %v449
    %526 = vmatpush2.bf16.msra.mxu0 %v448
    %527 = vmatprep.subr.bf16.mxu0 %v446
    %528 = vmatpush2.bf16.msra.mxu0 %v445
    %529 = vmatprep.subr.bf16.mxu0 %v443
    %530 = vmatpush2.bf16.msra.mxu0 %v442
    %531 = vmatprep.subr.bf16.mxu0 %v440
    %532 = vmatpush2.bf16.msra.mxu0 %v439
    %533 = vmatprep.subr.bf16.mxu0 %v437
    %534 = vmatpush2.bf16.msra.mxu0 %v436
    %535 = vmatprep.subr.bf16.mxu0 %v434
    %536 = vmatpush2.bf16.msra.mxu0 %v433
    %537 = vmatprep.mubr.bf16.mxu0 %v167
    %538 = vmatmul.mubr.bf16.gmra.mxu0 %v166
    %v539 = vpop.f32.mrf.mxu0
    %v540 = vadd.f32 %v237, %v539
    %v541 = vpop.f32.mrf.mxu0
    %v542 = vadd.f32 %v241, %v541
    %v543 = vpop.f32.mrf.mxu0
    %v544 = vpop.f32.mrf.mxu0
    %545 = vdwg.mxu0
    %546 = vmatprep.subr.bf16.mxu0 0
    %547 = vmatpush1.bf16.msra.mxu0 %v432
    %548 = vmatprep.subr.bf16.mxu0 0
    %549 = vmatpush1.bf16.msra.mxu0 %v429
    %550 = vmatprep.subr.bf16.mxu0 0
    %551 = vmatpush1.bf16.msra.mxu0 %v426
    %552 = vmatprep.subr.bf16.mxu0 0
    %553 = vmatpush1.bf16.msra.mxu0 %v423
    %554 = vmatprep.subr.bf16.mxu0 0
    %555 = vmatpush1.bf16.msra.mxu0 %v420
    %556 = vmatprep.subr.bf16.mxu0 0
    %557 = vmatpush1.bf16.msra.mxu0 %v417
    %558 = vmatprep.subr.bf16.mxu0 0
    %559 = vmatpush1.bf16.msra.mxu0 %v414
    %560 = vmatprep.subr.bf16.mxu0 0
    %561 = vmatpush1.bf16.msra.mxu0 %v411
    %562 = vmatprep.subr.bf16.mxu0 0
    %563 = vmatpush2.bf16.msra.mxu0 %v456
    %564 = vmatprep.subr.bf16.mxu0 0
    %565 = vmatpush2.bf16.msra.mxu0 %v453
    %566 = vmatprep.subr.bf16.mxu0 0
    %567 = vmatpush2.bf16.msra.mxu0 %v450
    %568 = vmatprep.subr.bf16.mxu0 0
    %569 = vmatpush2.bf16.msra.mxu0 %v447
    %570 = vmatprep.subr.bf16.mxu0 0
    %571 = vmatpush2.bf16.msra.mxu0 %v444
    %572 = vmatprep.subr.bf16.mxu0 0
    %573 = vmatpush2.bf16.msra.mxu0 %v441
    %574 = vmatprep.subr.bf16.mxu0 0
    %575 = vmatpush2.bf16.msra.mxu0 %v438
    %576 = vmatprep.subr.bf16.mxu0 0
    %577 = vmatpush2.bf16.msra.mxu0 %v435
    %578 = vmatprep.mubr.bf16.mxu0 %v167
    %579 = vmatmul.mubr.bf16.gmra.mxu0 %v166
    %v580 = vpop.f32.mrf.mxu0
    %v581 = vadd.f32 %v245, %v580
    %v582 = vpop.f32.mrf.mxu0
    %v583 = vpop.f32.mrf.mxu0
    %v584 = vpop.f32.mrf.mxu0
    %585 = vdwg.mxu0
    %v586 = vmax.f32 %v540, 0.0
    %v587 = vmax.f32 %v542, 0.0
    %v588 = vmax.f32 %v581, 0.0
    %v589 = vpack.c.bf16 %v586, %v586
    %v590 = vpack.c.bf16 %v587, %v587
    %v591 = vpack.c.bf16 %v588, %v588
    %v592 = vld [vmem:[#allocation8] sm:$0xf]
    %v593 = vld [vmem:[#allocation8 + $0x4] sm:$0xf]
    %v594 = vld [vmem:[#allocation8 + $0x8] sm:$0xf]
    %v595 = vld [vmem:[#allocation8 + $0xc] sm:$0xf]
    %v596 = vld [vmem:[#allocation8 + $0x10] sm:$0xf]
    %v597 = vld [vmem:[#allocation8 + $0x14] sm:$0xf]
    %v598 = vld [vmem:[#allocation8 + $0x18] sm:$0xf]
    %v599 = vld [vmem:[#allocation8 + $0x1c] sm:$0xf]
    %v600 = vld [vmem:[#allocation8 + $0x20] sm:$0xf]
    %v601 = vld [vmem:[#allocation8 + $0x24] sm:$0xf]
    %v602 = vld [vmem:[#allocation8 + $0x28] sm:$0xf]
    %v603 = vld [vmem:[#allocation8 + $0x2c] sm:$0xf]
    %v604 = vld [vmem:[#allocation8 + $0x30] sm:$0xf]
    %v605 = vld [vmem:[#allocation8 + $0x34] sm:$0xf]
    %v606 = vld [vmem:[#allocation8 + $0x38] sm:$0xf]
    %v607 = vld [vmem:[#allocation8 + $0x3c] sm:$0xf]
    %v608 = vld [vmem:[#allocation8 + $0x40] sm:$0xf]
    %v609 = vld [vmem:[#allocation8 + $0x44] sm:$0xf]
    %v610 = vld [vmem:[#allocation8 + $0x48] sm:$0xf]
    %v611 = vld [vmem:[#allocation8 + $0x4c] sm:$0xf]
    %v612 = vld [vmem:[#allocation8 + $0x50] sm:$0xf]
    %v613 = vld [vmem:[#allocation8 + $0x54] sm:$0xf]
    %v614 = vld [vmem:[#allocation8 + $0x58] sm:$0xf]
    %v615 = vld [vmem:[#allocation8 + $0x5c] sm:$0xf]
    %v616 = vld [vmem:[#allocation8 + $0x60] sm:$0xf]
    %v617 = vld [vmem:[#allocation8 + $0x64] sm:$0xf]
    %v618 = vld [vmem:[#allocation8 + $0x68] sm:$0xf]
    %v619 = vld [vmem:[#allocation8 + $0x6c] sm:$0xf]
    %v620 = vld [vmem:[#allocation8 + $0x70] sm:$0xf]
    %v621 = vld [vmem:[#allocation8 + $0x74] sm:$0xf]
    %v622 = vld [vmem:[#allocation8 + $0x78] sm:$0xf]
    %v623 = vld [vmem:[#allocation8 + $0x7c] sm:$0xf]
    %v624 = vld [vmem:[#allocation8 + $0x80] sm:$0xf]
    %v625 = vld [vmem:[#allocation8 + $0x84] sm:$0xf]
    %v626 = vld [vmem:[#allocation8 + $0x88] sm:$0xf]
    %v627 = vld [vmem:[#allocation8 + $0x8c] sm:$0xf]
    %v628 = vld [vmem:[#allocation8 + $0x90] sm:$0xf]
    %v629 = vld [vmem:[#allocation8 + $0x94] sm:$0xf]
    %v630 = vld [vmem:[#allocation8 + $0x98] sm:$0xf]
    %v631 = vld [vmem:[#allocation8 + $0x9c] sm:$0xf]
    %v632 = vld [vmem:[#allocation8 + $0xa0] sm:$0xf]
    %v633 = vld [vmem:[#allocation8 + $0xa4] sm:$0xf]
    %v634 = vld [vmem:[#allocation8 + $0xa8] sm:$0xf]
    %v635 = vld [vmem:[#allocation8 + $0xac] sm:$0xf]
    %v636 = vld [vmem:[#allocation8 + $0xb0] sm:$0xf]
    %v637 = vld [vmem:[#allocation8 + $0xb4] sm:$0xf]
    %v638 = vld [vmem:[#allocation8 + $0xb8] sm:$0xf]
    %v639 = vld [vmem:[#allocation8 + $0xbc] sm:$0xf]
    %v640 = vld [vmem:[%s6] sm:$0x1]
    %v642 = vlaneseq
    %v643 = vshrl.u32 %v642, 7
    %v644 = vsub.s32 0, %v643
    %v645 = vrot.slane %v640, %v644
    %v695 = vunpack.c.l.b16 %v592
    %v696 = vunpack.c.l.b16 %v593
    %v697 = vunpack.c.l.b16 %v594
    %v698 = vunpack.c.l.b16 %v595
    %v699 = vunpack.c.l.b16 %v596
    %v700 = vunpack.c.l.b16 %v597
    %v701 = vunpack.c.l.b16 %v598
    %v702 = vunpack.c.l.b16 %v599
    %v703 = vunpack.c.l.b16 %v600
    %v704 = vunpack.c.l.b16 %v601
    %v705 = vunpack.c.l.b16 %v602
    %v706 = vunpack.c.l.b16 %v603
    %v707 = vunpack.c.l.b16 %v604
    %v708 = vunpack.c.l.b16 %v605
    %v709 = vunpack.c.l.b16 %v606
    %v710 = vunpack.c.l.b16 %v607
    %v711 = vunpack.c.l.b16 %v608
    %v712 = vunpack.c.l.b16 %v609
    %v713 = vunpack.c.l.b16 %v610
    %v714 = vunpack.c.l.b16 %v611
    %v715 = vunpack.c.l.b16 %v612
    %v716 = vunpack.c.l.b16 %v613
    %v717 = vunpack.c.l.b16 %v614
    %v718 = vunpack.c.l.b16 %v615
    %v719 = vunpack.c.l.b16 %v616
    %v720 = vunpack.c.l.b16 %v617
    %v721 = vunpack.c.l.b16 %v618
    %v722 = vunpack.c.l.b16 %v619
    %v723 = vunpack.c.l.b16 %v620
    %v724 = vunpack.c.l.b16 %v621
    %v725 = vunpack.c.l.b16 %v622
    %v726 = vunpack.c.l.b16 %v623
    %v727 = vunpack.c.l.b16 %v624
    %v728 = vunpack.c.l.b16 %v625
    %v729 = vunpack.c.l.b16 %v626
    %v730 = vunpack.c.l.b16 %v627
    %v731 = vunpack.c.l.b16 %v628
    %v732 = vunpack.c.l.b16 %v629
    %v733 = vunpack.c.l.b16 %v630
    %v734 = vunpack.c.l.b16 %v631
    %v735 = vunpack.c.l.b16 %v632
    %v736 = vunpack.c.l.b16 %v633
    %v737 = vunpack.c.l.b16 %v634
    %v738 = vunpack.c.l.b16 %v635
    %v739 = vunpack.c.l.b16 %v636
    %v740 = vunpack.c.l.b16 %v637
    %v741 = vunpack.c.l.b16 %v638
    %v742 = vunpack.c.l.b16 %v639
    %v743 = vpack.c.b16 %v696, %v695
    %v744 = vpack.c.b16 %v698, %v697
    %v745 = vpack.c.b16 %v700, %v699
    %v746 = vpack.c.b16 %v702, %v701
    %v747 = vpack.c.b16 %v704, %v703
    %v748 = vpack.c.b16 %v706, %v705
    %v749 = vpack.c.b16 %v708, %v707
    %v750 = vpack.c.b16 %v710, %v709
    %v751 = vpack.c.b16 %v712, %v711
    %v752 = vpack.c.b16 %v714, %v713
    %v753 = vpack.c.b16 %v716, %v715
    %v754 = vpack.c.b16 %v718, %v717
    %v755 = vpack.c.b16 %v720, %v719
    %v756 = vpack.c.b16 %v722, %v721
    %v757 = vpack.c.b16 %v724, %v723
    %v758 = vpack.c.b16 %v726, %v725
    %v759 = vpack.c.b16 %v728, %v727
    %v760 = vpack.c.b16 %v730, %v729
    %v761 = vpack.c.b16 %v732, %v731
    %v762 = vpack.c.b16 %v734, %v733
    %v763 = vpack.c.b16 %v736, %v735
    %v764 = vpack.c.b16 %v738, %v737
    %v765 = vpack.c.b16 %v740, %v739
    %v766 = vpack.c.b16 %v742, %v741
    %791 = vmatprep.subr.bf16.mxu0 0
    %792 = vmatpush1.bf16.msra.mxu0 %v750
    %793 = vmatprep.subr.bf16.mxu0 0
    %794 = vmatpush1.bf16.msra.mxu0 %v749
    %795 = vmatprep.subr.bf16.mxu0 0
    %796 = vmatpush1.bf16.msra.mxu0 %v748
    %797 = vmatprep.subr.bf16.mxu0 0
    %798 = vmatpush1.bf16.msra.mxu0 %v747
    %799 = vmatprep.subr.bf16.mxu0 0
    %800 = vmatpush1.bf16.msra.mxu0 %v746
    %801 = vmatprep.subr.bf16.mxu0 0
    %802 = vmatpush1.bf16.msra.mxu0 %v745
    %803 = vmatprep.subr.bf16.mxu0 0
    %804 = vmatpush1.bf16.msra.mxu0 %v744
    %805 = vmatprep.subr.bf16.mxu0 0
    %806 = vmatpush1.bf16.msra.mxu0 %v743
    %807 = vmatprep.subr.bf16.mxu0 0
    %808 = vmatpush2.bf16.msra.mxu0 %v758
    %809 = vmatprep.subr.bf16.mxu0 0
    %810 = vmatpush2.bf16.msra.mxu0 %v757
    %811 = vmatprep.subr.bf16.mxu0 0
    %812 = vmatpush2.bf16.msra.mxu0 %v756
    %813 = vmatprep.subr.bf16.mxu0 0
    %814 = vmatpush2.bf16.msra.mxu0 %v755
    %815 = vmatprep.subr.bf16.mxu0 0
    %816 = vmatpush2.bf16.msra.mxu0 %v754
    %817 = vmatprep.subr.bf16.mxu0 0
    %818 = vmatpush2.bf16.msra.mxu0 %v753
    %819 = vmatprep.subr.bf16.mxu0 0
    %820 = vmatpush2.bf16.msra.mxu0 %v752
    %821 = vmatprep.subr.bf16.mxu0 0
    %822 = vmatpush2.bf16.msra.mxu0 %v751
    %823 = vmatprep.mubr.bf16.mxu0 %v590
    %824 = vmatmul.mubr.bf16.gmra.mxu0 %v589
    %v825 = vpop.f32.mrf.mxu0
    %v826 = vadd.f32 %v645, %v825
    %v827 = vpop.f32.mrf.mxu0
    %v828 = vpop.f32.mrf.mxu0
    %v829 = vpop.f32.mrf.mxu0
    %830 = vdwg.mxu0
    %831 = vmatprep.subr.bf16.mxu0 0
    %832 = vmatpush1.bf16.msra.mxu0 %v766
    %833 = vmatprep.subr.bf16.mxu0 0
    %834 = vmatpush1.bf16.msra.mxu0 %v765
    %835 = vmatprep.subr.bf16.mxu0 0
    %836 = vmatpush1.bf16.msra.mxu0 %v764
    %837 = vmatprep.subr.bf16.mxu0 0
    %838 = vmatpush1.bf16.msra.mxu0 %v763
    %839 = vmatprep.subr.bf16.mxu0 0
    %840 = vmatpush1.bf16.msra.mxu0 %v762
    %841 = vmatprep.subr.bf16.mxu0 0
    %842 = vmatpush1.bf16.msra.mxu0 %v761
    %843 = vmatprep.subr.bf16.mxu0 0
    %844 = vmatpush1.bf16.msra.mxu0 %v760
    %845 = vmatprep.subr.bf16.mxu0 0
    %846 = vmatpush1.bf16.msra.mxu0 %v759
    %847 = vmatprep.subr.bf16.mxu0 0
    %848 = vmatpush2.bf16.msra.mxu0 0
    %849 = vmatprep.subr.bf16.mxu0 0
    %850 = vmatpush2.bf16.msra.mxu0 0
    %851 = vmatprep.subr.bf16.mxu0 0
    %852 = vmatpush2.bf16.msra.mxu0 0
    %853 = vmatprep.subr.bf16.mxu0 0
    %854 = vmatpush2.bf16.msra.mxu0 0
    %855 = vmatprep.subr.bf16.mxu0 0
    %856 = vmatpush2.bf16.msra.mxu0 0
    %857 = vmatprep.subr.bf16.mxu0 0
    %858 = vmatpush2.bf16.msra.mxu0 0
    %859 = vmatprep.subr.bf16.mxu0 0
    %860 = vmatpush2.bf16.msra.mxu0 0
    %861 = vmatprep.subr.bf16.mxu0 0
    %862 = vmatpush2.bf16.msra.mxu0 0
    %863 = vmatprep.mubr.bf16.mxu0 0
    %864 = vmatmul.mubr.bf16.gmra.mxu0 %v591
    %v865 = vpop.f32.mrf.mxu0
    %v866 = vadd.f32 %v826, %v865
    %v867 = vpop.f32.mrf.mxu0
    %v868 = vpop.f32.mrf.mxu0
    %v869 = vpop.f32.mrf.mxu0
    %870 = vdwg.mxu0
    %v871 = vtanh.pop %v866
    %v872 = vmul.f32 %v871, 2.0
    %873 = vst [vmem:[#allocation10] sm:$0xff] %v872
    // Predicated region
    $region46: #{tpu_custom_call.1} parent=1 // pred_check
      _
    $region47: #{tpu_custom_call.1} parent=1 // pred_check_branch
      %875 = sbr.rel (0) target = $region49
    $region48: #{tpu_custom_call.1} parent=1 // pred_region
      %s877 = ssub.s32 128, 128
      %878 = vsyncadd [#allocation4], %s877
      %s880 = sshll.u32 [#allocation10], 4
      %s881 = int_to_ptr.vmem [resolvable:$true] %s880
      %883 = dma.vmem_to_hbm [thread:$0]  %s881, 128, %s7, [#allocation4]
    $region49: #{tpu_custom_call.1} parent=1 // pred_fallthru
      _
    // Predicated region
    $region50: #{tpu_custom_call.1} parent=1 // pred_check
      _
    $region51: #{tpu_custom_call.1} parent=1 // pred_check_branch
      %885 = sbr.rel (0) target = $region53
    $region52: #{tpu_custom_call.1} parent=1 // pred_region
      %886 = dma.done [#allocation4], 128
    $region53: #{tpu_custom_call.1} parent=1 // pred_fallthru
      _
    %887 = vsyncpa [#allocation3], 1
    %888 = vsyncpa [#allocation6], 1
    %889 = vsyncpa [#allocation9], 1
    %890 = vsyncpa [#allocation4], 1

</llo_original>
